<compile_context>
chip_gen: v7x
topology: tpu7x:2x2x1
jax: 0.10.0
libtpu: 0.0.40
codegen_flags: <defaults>
</compile_context>

<pallas_src>
import functools

import jax
import jax.numpy as jnp
from jax.experimental import pallas as pl
from jax.experimental.pallas import tpu as pltpu


def _cdiv(a, b):
    return (a + b - 1) // b


def _round_up(a, b):
    return _cdiv(a, b) * b


def _tree_add(chunks):
    """Pairwise tree-add a list of equal-shaped arrays (pure VALU vreg adds)."""
    while len(chunks) > 1:
        nxt = [chunks[j] + chunks[j + 1] for j in range(0, len(chunks) - 1, 2)]
        if len(chunks) % 2:
            nxt.append(chunks[-1])
        chunks = nxt
    return chunks[0]


def _tpu_info():
    """Best-effort (vmem_bytes, num_tensorcores) for the current device."""
    vmem = None
    cores = None
    get_info = getattr(pltpu, "get_tpu_info", None)
    if get_info is not None:
        try:
            info = get_info()
            for a in ("vmem_capacity_bytes", "vmem_size_bytes", "vmem_bytes"):
                v = getattr(info, a, None)
                if v:
                    vmem = int(v)
                    break
            for a in ("num_cores", "num_tensorcores", "tensor_cores_per_chip",
                      "cores_per_chip"):
                v = getattr(info, a, None)
                if v:
                    cores = int(v)
                    break
        except Exception:
            pass
    kind = ""
    try:
        kind = jax.devices()[0].device_kind.lower()
    except Exception:
        pass
    if vmem is None:
        if "v2" in kind or "v3" in kind:
            vmem = 16 * 2**20
        elif "7" in kind:
            vmem = 64 * 2**20          # v7x: 64 MiB per TensorCore
        else:
            vmem = 128 * 2**20         # v4 / v5e / v5p / v6e
    if cores is None:
        lite = ("lite" in kind) or ("v5e" in kind) or ("v6e" in kind)
        cores = 1 if lite else 2
    return vmem, cores


def _tv_kernel(x_ref, wgt_ref, out_ref, acc_ref, *pad_scratch, hw, lp, w):
    """Accumulate weighted squared H/W forward differences for one (TB, hw) slab."""
    i = pl.program_id(1)              # reduction ("arbitrary") axis — innermost
    ragged = len(pad_scratch) > 0     # static: H*W not a multiple of 128

    @pl.when(i == 0)
    def _init():
        acc_ref[...] = jnp.zeros_like(acc_ref)
        if ragged:
            # Zero once so the [hw, lp) tail lanes stay finite (0) forever;
            # the lane weights already exclude them from the sum.
            pad_scratch[0][...] = jnp.zeros_like(pad_scratch[0])

    if ragged:
        pad_ref = pad_scratch[0]
        pad_ref[:, :hw] = x_ref[...].astype(jnp.float32)    # masked lane store
        x = pad_ref[...]                                     # (TB, lp) f32
    else:
        x = x_ref[...].astype(jnp.float32)                   # (TB, lp) f32

    # Precomputed lane weights (scale / count folded in, zero at every wrapped
    # or padded lane) — VMEM-resident, no per-step mask math.
    wh = wgt_ref[0:1, :]                                     # (1, lp)
    ww = wgt_ref[1:2, :]                                     # (1, lp)

    # Forward differences via XLU lane rolls: pair lane p with p+w / p+1.
    dh = pltpu.roll(x, lp - w, axis=1) - x
    dw = pltpu.roll(x, lp - 1, axis=1) - x
    contrib = dh * dh * wh + dw * dw * ww                    # (TB, lp)

    # Tree-add 128-lane chunks (pure VALU vreg adds) -> one small += per step.
    n_chunks = lp // 128
    chunks = [contrib[:, j * 128:(j + 1) * 128] for j in range(n_chunks)]
    acc_ref[...] += _tree_add(chunks)

    # Single scalar reduction + one lane-dense output write at the very end.
    @pl.when(i == pl.num_programs(1) - 1)
    def _finalize():
        s = jnp.sum(acc_ref[...])
        out_ref[...] = jnp.full(out_ref.shape, s, dtype=out_ref.dtype)


def tv_loss(x, tv_loss_weight=1.0, *, max_block_bytes=None):
    """Total-variation smoothness loss (PyTorch TVLoss.forward semantics).

    x: (B, C, H, W) array (NCHW, like PyTorch).  Any float dtype; the kernel
    DMAs the native dtype and accumulates in float32.
    Precondition: H >= 2 and W >= 2.
    """
    b, c, h, w = x.shape
    if h < 2 or w < 2:
        raise ValueError("tv_loss requires H >= 2 and W >= 2 (PyTorch TVLoss "
                         "divides by C*(H-1)*W and C*H*(W-1)).")
    n = b * c
    hw = h * w
    lp = _round_up(hw, 128)
    ragged = lp != hw
    itemsize = jnp.dtype(x.dtype).itemsize

    # Free reshape: fold each (b, c) image onto the lane axis (lane-dense).
    xf = x.reshape(n, hw)

    vmem_cap, ncore_hw = _tpu_info()

    # Per-row VMEM cost: double-buffered input + (TB,128) f32 accumulator
    # (+ f32 pad scratch when H*W is not a 128 multiple).
    row_cost = 2 * lp * itemsize + 128 * 4 + (lp * 4 if ragged else 0)
    tb_cap = (int(vmem_cap * 0.55) // row_cost) // 8 * 8
    # Diminishing returns past ~16 MiB of streamed input per block.
    tb_cap = min(tb_cap, max(8, ((16 * 2**20) // (lp * itemsize)) // 8 * 8))
    if max_block_bytes is not None:
        tb_cap = min(tb_cap, max(1, max_block_bytes // (lp * itemsize)))
    tb_cap = max(8, (tb_cap // 8) * 8)

    # Split across TensorCores only when the work is big enough to matter.
    ncore = ncore_hw if (n >= 16 and n * lp * itemsize >= (2 << 20)) else 1

    if ncore > 1:
        tb = min(tb_cap, _round_up(_cdiv(n, ncore), 8))
    elif n <= tb_cap:
        tb = n                        # single full-rows block: no row padding
    else:
        tb = tb_cap
    tb = max(1, tb)
    num_blocks = _cdiv(n, tb)
    ncore = min(ncore, num_blocks)
    steps = _cdiv(num_blocks, ncore)
    n_pad = ncore * steps * tb

    if n_pad != n:
        # Zero rows contribute exactly 0; only hit in the multi-block case.
        xf = jnp.pad(xf, ((0, n_pad - n), (0, 0)))

    # Lane-weight table: 1/count and the final 2*weight/B scale folded in;
    # zero at every wrapped (last row / last column) or padded (>= hw) lane.
    count_h = c * (h - 1) * w
    count_w = c * h * (w - 1)
    scale = 2.0 * float(tv_loss_weight) / float(b)
    pos = jnp.arange(lp, dtype=jnp.int32)
    wh = jnp.where(pos < (h - 1) * w, scale / count_h, 0.0)
    ww = jnp.where((pos % w < (w - 1)) & (pos < hw), scale / count_w, 0.0)
    wgt = jnp.stack([wh, ww]).astype(jnp.float32)            # (2, lp)

    kernel = functools.partial(_tv_kernel, hw=hw, lp=lp, w=w)
    scratch = [pltpu.VMEM((tb, 128), jnp.float32)]           # small accumulator
    if ragged:
        scratch.append(pltpu.VMEM((tb, lp), jnp.float32))    # in-kernel pad buf

    need = tb * row_cost + 2 * (2 * lp * 4) + 2 * (8 * 128 * 4)
    vmem_limit = int(min(vmem_cap - (2 << 20), max(need + (16 << 20), 48 << 20)))

    out = pl.pallas_call(
        kernel,
        out_shape=jax.ShapeDtypeStruct((ncore, 8, 128), jnp.float32),
        grid_spec=pltpu.PrefetchScalarGridSpec(
            num_scalar_prefetch=0,
            grid=(ncore, steps),      # reduction axis (steps) is innermost
            in_specs=[
                pl.BlockSpec((tb, hw), lambda cc, i: (cc * steps + i, 0)),
                pl.BlockSpec((2, lp), lambda cc, i: (0, 0)),  # VMEM-resident
            ],
            out_specs=pl.BlockSpec((1, 8, 128), lambda cc, i: (cc, 0, 0)),
            scratch_shapes=scratch,
        ),
        compiler_params=pltpu.CompilerParams(
            dimension_semantics=("parallel", "arbitrary"),
            vmem_limit_bytes=vmem_limit,
        ),
    )(xf, wgt)

    # Per-core partial sums; scale and 1/count are already folded in.
    return jnp.sum(out[:, 0, 0])


def _tv_loss_ref(x, tv_loss_weight=1.0):
    """Pure-JAX reference (mirrors the PyTorch TVLoss math)."""
    b, c, h, w = x.shape
    xf = x.astype(jnp.float32)
    count_h = c * (h - 1) * w
    count_w = c * h * (w - 1)
    h_tv = jnp.sum((xf[:, :, 1:, :] - xf[:, :, : h - 1, :]) ** 2)
    w_tv = jnp.sum((xf[:, :, :, 1:] - xf[:, :, :, : w - 1]) ** 2)
    return tv_loss_weight * 2.0 * (h_tv / count_h + w_tv / count_w) / b


if __name__ == "__main__":
    key = jax.random.PRNGKey(0)
    k1, k2, k3, k4, k5 = jax.random.split(key, 5)

    # Case 1: module-sized example (single full-rows block, 256 dense lanes).
    x1 = jax.random.normal(k1, (2, 4, 16, 16), dtype=jnp.float32)
    out1 = jax.block_until_ready(tv_loss(x1, tv_loss_weight=1.0))
    ref1 = _tv_loss_ref(x1, tv_loss_weight=1.0)
    assert jnp.allclose(out1, ref1, rtol=1e-5, atol=1e-5), (out1, ref1)

    # Case 2: forced multi-block -> multi-step accumulation into the small acc.
    x2 = jax.random.normal(k2, (2, 16, 16, 16), dtype=jnp.float32)
    out2 = jax.block_until_ready(tv_loss(x2, max_block_bytes=8 * 1024))
    ref2 = _tv_loss_ref(x2)
    assert jnp.allclose(out2, ref2, rtol=1e-5, atol=1e-5), (out2, ref2)

    # Case 3: non-multiple-of-8 slice count, non-128-multiple H*W (ragged lane
    # tail handled fully in-kernel — no HBM-side lane pad), non-power-of-two W.
    x3 = jax.random.normal(k3, (2, 5, 12, 10), dtype=jnp.float32)
    out3 = jax.block_until_ready(tv_loss(x3, max_block_bytes=4 * 1024))
    ref3 = _tv_loss_ref(x3)
    assert jnp.allclose(out3, ref3, rtol=1e-5, atol=1e-5), (out3, ref3)

    # Case 4: bf16 input DMA'd in its native dtype, upcast inside the kernel.
    x4 = jax.random.normal(k4, (2, 4, 16, 16), dtype=jnp.float32).astype(jnp.bfloat16)
    out4 = jax.block_until_ready(tv_loss(x4))
    ref4 = _tv_loss_ref(x4)
    assert jnp.allclose(out4, ref4, rtol=1e-4, atol=1e-4), (out4, ref4)

    # Case 5: larger frame (2 MiB+) — exercises the bigger-block path and the
    # TensorCore split on multi-core parts (plain single block on 1-TC chips).
    x5 = jax.random.normal(k5, (2, 24, 128, 128), dtype=jnp.float32)
    out5 = jax.block_until_ready(tv_loss(x5))
    ref5 = _tv_loss_ref(x5)
    assert jnp.allclose(out5, ref5, rtol=2e-4, atol=1e-5), (out5, ref5)

    print("KERNEL_OK")
</pallas_src>

<mosaic_0001>
module attributes {stable_mosaic.version = 11 : i64} {
  func.func @_tv_kernel(%arg0: i32, %arg1: i32, %arg2: memref<8x256xf32, #tpu.memory_space<vmem>>, %arg3: memref<2x256xf32, #tpu.memory_space<vmem>>, %arg4: memref<1x8x128xf32, #tpu.memory_space<vmem>>, %arg5: memref<8x128xf32, #tpu.memory_space<vmem>>) attributes {dimension_semantics = [#tpu.dimension_semantics<parallel>, #tpu.dimension_semantics<arbitrary>], iteration_bounds = array<i64: 1, 1>, scalar_prefetch = 0 : i64, scratch_operands = 1 : i64, tpu.core_type = #tpu.core_type<tc>, window_params = [{transform_indices = @transform_0, window_bounds = array<i64: 8, 256>}, {pipeline_mode = #tpu.pipeline_mode<synchronous>, transform_indices = @transform_1, window_bounds = array<i64: 2, 256>}, {transform_indices = @transform_2, window_bounds = array<i64: 1, 8, 128>}]} {
    %c0_i32 = arith.constant 0 : i32
    %0 = arith.cmpi eq, %arg1, %c0_i32 : i32
    %1 = arith.extui %0 : i1 to i32
    %c0_i32_0 = arith.constant 0 : i32
    %2 = arith.cmpi ne, %1, %c0_i32_0 : i32
    scf.if %2 {
      %cst = arith.constant 0.000000e+00 : f32
      %26 = vector.broadcast %cst : f32 to vector<8x128xf32>
      %c0_11 = arith.constant 0 : index
      %c0_12 = arith.constant 0 : index
      %27 = vector.load %arg5[%c0_11, %c0_12] : memref<8x128xf32, #tpu.memory_space<vmem>>, vector<8x128xf32>
      tpu.vector_store %arg5[%c0_11, %c0_12], %26 {strides = array<i32>} : memref<8x128xf32, #tpu.memory_space<vmem>>, vector<8x128xf32>,
    } else {
    }
    %c0 = arith.constant 0 : index
    %c0_1 = arith.constant 0 : index
    %3 = vector.load %arg2[%c0, %c0_1] : memref<8x256xf32, #tpu.memory_space<vmem>>, vector<8x256xf32>
    %c0_2 = arith.constant 0 : index
    %c0_3 = arith.constant 0 : index
    %4 = vector.load %arg3[%c0_2, %c0_3] : memref<2x256xf32, #tpu.memory_space<vmem>>, vector<1x256xf32>
    %c1 = arith.constant 1 : index
    %c0_4 = arith.constant 0 : index
    %5 = vector.load %arg3[%c1, %c0_4] : memref<2x256xf32, #tpu.memory_space<vmem>>, vector<1x256xf32>
    %c240_i32 = arith.constant 240 : i32
    %6 = tpu.dynamic_rotate %3 by %c240_i32 dim 1 : vector<8x256xf32>, i32 -> vector<8x256xf32>
    %7 = arith.subf %6, %3 : vector<8x256xf32>
    %c255_i32 = arith.constant 255 : i32
    %8 = tpu.dynamic_rotate %3 by %c255_i32 dim 1 : vector<8x256xf32>, i32 -> vector<8x256xf32>
    %9 = arith.subf %8, %3 : vector<8x256xf32>
    %10 = arith.mulf %7, %7 : vector<8x256xf32>
    %11 = vector.broadcast %4 : vector<1x256xf32> to vector<8x256xf32>
    %12 = arith.mulf %10, %11 : vector<8x256xf32>
    %13 = arith.mulf %9, %9 : vector<8x256xf32>
    %14 = vector.broadcast %5 : vector<1x256xf32> to vector<8x256xf32>
    %15 = arith.mulf %13, %14 : vector<8x256xf32>
    %16 = arith.addf %12, %15 : vector<8x256xf32>
    %17 = vector.extract_strided_slice %16 {offsets = [0, 0], sizes = [8, 128], strides = [1, 1]} : vector<8x256xf32> to vector<8x128xf32>
    %18 = vector.extract_strided_slice %16 {offsets = [0, 128], sizes = [8, 128], strides = [1, 1]} : vector<8x256xf32> to vector<8x128xf32>
    %c0_5 = arith.constant 0 : index
    %c0_6 = arith.constant 0 : index
    %19 = vector.load %arg5[%c0_5, %c0_6] : memref<8x128xf32, #tpu.memory_space<vmem>>, vector<8x128xf32>
    %20 = arith.addf %17, %18 : vector<8x128xf32>
    %21 = arith.addf %19, %20 : vector<8x128xf32>
    %c0_7 = arith.constant 0 : index
    %c0_8 = arith.constant 0 : index
    %22 = vector.load %arg5[%c0_7, %c0_8] : memref<8x128xf32, #tpu.memory_space<vmem>>, vector<8x128xf32>
    tpu.vector_store %arg5[%c0_7, %c0_8], %21 {strides = array<i32>} : memref<8x128xf32, #tpu.memory_space<vmem>>, vector<8x128xf32>,
    %c0_i32_9 = arith.constant 0 : i32
    %23 = arith.cmpi eq, %arg1, %c0_i32_9 : i32
    %24 = arith.extui %23 : i1 to i32
    %c0_i32_10 = arith.constant 0 : i32
    %25 = arith.cmpi ne, %24, %c0_i32_10 : i32
    scf.if %25 {
      %c0_11 = arith.constant 0 : index
      %c0_12 = arith.constant 0 : index
      %26 = vector.load %arg5[%c0_11, %c0_12] : memref<8x128xf32, #tpu.memory_space<vmem>>, vector<8x128xf32>
      %27 = vector.shape_cast %26 : vector<8x128xf32> to vector<1x8x128xf32>
      %cst = arith.constant dense<0.000000e+00> : vector<1xf32>
      %28 = vector.multi_reduction <add>, %27, %cst [1, 2] : vector<1x8x128xf32> to vector<1xf32>
      %29 = vector.shape_cast %28 : vector<1xf32> to vector<1x1x1xf32>
      %30 = vector.extract %29[0, 0, 0] : f32 from vector<1x1x1xf32>
      %31 = vector.broadcast %30 : f32 to vector<1x8x128xf32>
      %c0_13 = arith.constant 0 : index
      %c0_14 = arith.constant 0 : index
      %c0_15 = arith.constant 0 : index
      %32 = vector.load %arg4[%c0_13, %c0_14, %c0_15] : memref<1x8x128xf32, #tpu.memory_space<vmem>>, vector<1x8x128xf32>
      tpu.vector_store %arg4[%c0_13, %c0_14, %c0_15], %31 {strides = array<i32>} : memref<1x8x128xf32, #tpu.memory_space<vmem>>, vector<1x8x128xf32>,
    } else {
    }
    return
  }
  func.func @transform_0(%arg0: i32, %arg1: i32) -> (i32, i32) {
    %c1_i32 = arith.constant 1 : i32
    %0 = arith.muli %arg0, %c1_i32 : i32
    %1 = arith.addi %0, %arg1 : i32
    %c0_i32 = arith.constant 0 : i32
    %c0_i32_0 = arith.constant 0 : i32
    return %1, %c0_i32 : i32, i32
  }
  func.func @transform_1(%arg0: i32, %arg1: i32) -> (i32, i32) {
    %c0_i32 = arith.constant 0 : i32
    %c0_i32_0 = arith.constant 0 : i32
    %c0_i32_1 = arith.constant 0 : i32
    return %c0_i32, %c0_i32_0 : i32, i32
  }
  func.func @transform_2(%arg0: i32, %arg1: i32) -> (i32, i32, i32) {
    %c0_i32 = arith.constant 0 : i32
    %c0_i32_0 = arith.constant 0 : i32
    %c0_i32_1 = arith.constant 0 : i32
    return %arg0, %c0_i32, %c0_i32_0 : i32, i32, i32
  }
}

</mosaic_0001>

<llo_original>
// kernel: tpu_custom_call.1
$region0: #{tpu_custom_call.1}
  #allocation0 [shape = 'u32[]', space=smem, size = 0x4, offset = 0x4, fixed_abs, tag = 'smem constant byte address 0x4 - core index']
  #allocation1 [shape = 'u32[144,128]{1,0:T(1,128)}', space=vmem, size = 0x12000, scoped, tag = 'internal scratch']
  #allocation2 [shape = 'f32[8,128]{1,0:T(8,128)}', space=vmem, size = 0x1000, scoped, tag = 'scratch operand']
  %s0 = inlined_call_operand.hbm [shape: f32[8,256], index: 0, kind: input, shape index: {}]
  %s1 = inlined_call_operand.hbm [shape: f32[2,256], index: 1, kind: input, shape index: {}]
  %s2 = inlined_call_operand.hbm [shape: f32[1,8,128], index: 2, kind: output, shape index: {}]
  %s3 = sld [smem:[#allocation0]]
  $region34: #{tpu_custom_call.1} parent=0
    _
  %s5 = ssub.s32 1, %s3
  %s6 = scalar_select 0, %s5, %s3
  $region1: #{tpu_custom_call.1} parent=0
    #allocation3 [shape = 'u8[8192]{0}', space=vmem, size = 0x2000, scoped, tag = 'input window, operand 0, single buffered']
    #allocation4 [shape = 's32[1]{0}', space=sflag, size = 0x4, scoped, tag = 'scoped memory for tpu_custom_call.1']
    #allocation5 [shape = 's32[1]{0}', space=sflag, size = 0x4, scoped, tag = 'scoped memory for tpu_custom_call.1']
    #allocation6 [shape = 'u8[2048]{0}', space=vmem, size = 0x800, scoped, tag = 'input window, operand 1, single buffered']
    #allocation7 [shape = 's32[1]{0}', space=sflag, size = 0x4, scoped, tag = 'scoped memory for tpu_custom_call.1']
    #allocation8 [shape = 'u8[4096]{0}', space=vmem, size = 0x1000, scoped, tag = 'output window, operand 0, single buffered']
    %7 = vsyncpa [#allocation4], 0
    %8 = vsyncpa [#allocation7], 0
    %9 = vsyncpa [#allocation5], 0
    // Predicated region
    $region2: #{tpu_custom_call.1} parent=1 // pred_check
      _
    $region3: #{tpu_custom_call.1} parent=1 // pred_check_branch
      %11 = sbr.rel (0) target = $region5
    $region4: #{tpu_custom_call.1} parent=1 // pred_region
      %s12 = sadd.s32 0, 0
      %s14 = ssub.s32 256, 256
      %15 = vsyncadd [#allocation4], %s14
      %s16 = smul.addr %s12, 2
      %s17 = smul.addr %s16, 128
      %s18 = scalar_lea.hbm %s0, %s17
      %s20 = sshll.u32 [#allocation3], 4
      %s21 = int_to_ptr.vmem [resolvable:$true] %s20
      %23 = dma.hbm_to_vmem [thread:$0]  %s18, 256, %s21, [#allocation4]
    $region5: #{tpu_custom_call.1} parent=1 // pred_fallthru
      _
    // Predicated region
    $region6: #{tpu_custom_call.1} parent=1 // pred_check
      _
    $region7: #{tpu_custom_call.1} parent=1 // pred_check_branch
      %25 = sbr.rel (0) target = $region9
    $region8: #{tpu_custom_call.1} parent=1 // pred_region
      %s27 = ssub.s32 64, 64
      %28 = vsyncadd [#allocation7], %s27
      %s30 = sshll.u32 [#allocation6], 4
      %s31 = int_to_ptr.vmem [resolvable:$true] %s30
      %33 = dma.hbm_to_vmem [thread:$0]  %s1, 64, %s31, [#allocation7]
    $region9: #{tpu_custom_call.1} parent=1 // pred_fallthru
      _
    // Predicated region
    $region10: #{tpu_custom_call.1} parent=1 // pred_check
      _
    $region11: #{tpu_custom_call.1} parent=1 // pred_check_branch
      %35 = sbr.rel (0) target = $region13
    $region12: #{tpu_custom_call.1} parent=1 // pred_region
      %36 = dma.done [#allocation4], 256
    $region13: #{tpu_custom_call.1} parent=1 // pred_fallthru
      _
    // Predicated region
    $region14: #{tpu_custom_call.1} parent=1 // pred_check
      _
    $region15: #{tpu_custom_call.1} parent=1 // pred_check_branch
      %38 = sbr.rel (0) target = $region17
    $region16: #{tpu_custom_call.1} parent=1 // pred_region
      %39 = dma.done [#allocation7], 64
    $region17: #{tpu_custom_call.1} parent=1 // pred_fallthru
      _
    %s40 = sadd.s32 0, 0
    %p41 = scmp.eq.s32.totalorder 0, 0
    // Predicated region
    $region18: #{tpu_custom_call.1} parent=1 // pred_check
      %p42 = pneg %p41
    $region19: #{tpu_custom_call.1} parent=1 // pred_check_branch
      %44 = sbr.rel (%p42) target = $region21
    $region20: #{tpu_custom_call.1} parent=1 // pred_region
      %45 = vst [vmem:[#allocation2] sm:$0xff] 0.0
    $region21: #{tpu_custom_call.1} parent=1 // pred_fallthru
      _
    %v46 = vld [vmem:[#allocation3] sm:$0xff]
    %v47 = vld [vmem:[#allocation3 + $0x8] sm:$0xff]
    %v48 = vld [vmem:[#allocation6] ss:$2 sm:$0x3]
    %s49 = scalar_lea.vmem [#allocation6], 1
    %v50 = vld [vmem:[%s49] ss:$2 sm:$0x3]
    %51 = vrot.lane.b32.xlu0 %v46, 112
    %v52 = vpop.permute.xlu0 %51
    %53 = vrot.lane.b32.xlu0 %v47, 112
    %v54 = vpop.permute.xlu0 %53
    %v55 = vlaneseq
    %v56 = vand.u32 %v55, 127
    %vm57 = vcmp.lt.s32.totalorder %v56, 112
    %v58 = vsel %vm57, %v52, %v54
    %v59 = vsel %vm57, %v54, %v52
    %v60 = vsub.f32 %v58, %v46
    %v61 = vsub.f32 %v59, %v47
    %62 = vrot.lane.b32.xlu0 %v46, 127
    %v63 = vpop.permute.xlu0 %62
    %64 = vrot.lane.b32.xlu0 %v47, 127
    %v65 = vpop.permute.xlu0 %64
    %vm66 = vcmp.lt.s32.totalorder %v56, 127
    %v67 = vsel %vm66, %v63, %v65
    %v68 = vsel %vm66, %v65, %v63
    %v69 = vsub.f32 %v67, %v46
    %v70 = vsub.f32 %v68, %v47
    %v71 = vmul.f32 %v60, %v60
    %v72 = vmul.f32 %v61, %v61
    %v74 = vlaneseq
    %v75 = vshrl.u32 %v74, 7
    %v76 = vsub.s32 0, %v75
    %v77 = vrot.slane %v48, %v76
    %v78 = vlaneseq
    %v79 = vshrl.u32 %v78, 7
    %v80 = vsub.s32 1, %v79
    %v81 = vrot.slane %v48, %v80
    %v84 = vmul.f32 %v71, %v77
    %v85 = vmul.f32 %v72, %v81
    %v86 = vmul.f32 %v69, %v69
    %v87 = vmul.f32 %v70, %v70
    %v89 = vlaneseq
    %v90 = vshrl.u32 %v89, 7
    %v91 = vsub.s32 0, %v90
    %v92 = vrot.slane %v50, %v91
    %v93 = vlaneseq
    %v94 = vshrl.u32 %v93, 7
    %v95 = vsub.s32 1, %v94
    %v96 = vrot.slane %v50, %v95
    %v99 = vmul.f32 %v86, %v92
    %v100 = vmul.f32 %v87, %v96
    %v101 = vadd.f32 %v84, %v99
    %v102 = vadd.f32 %v85, %v100
    %v103 = vld [vmem:[#allocation2] sm:$0xff]
    %v104 = vadd.f32 %v101, %v102
    %v105 = vadd.f32 %v103, %v104
    %106 = vst [vmem:[#allocation2] sm:$0xff] %v105
    // Predicated region
    $region22: #{tpu_custom_call.1} parent=1 // pred_check
      %p107 = pneg %p41
    $region23: #{tpu_custom_call.1} parent=1 // pred_check_branch
      %109 = sbr.rel (%p107) target = $region25
    $region24: #{tpu_custom_call.1} parent=1 // pred_region
      %v110 = vld [vmem:[#allocation2] sm:$0xff]
      %111 = vadd.xlane.f32.xlu0 %v110
      %v112 = vpop.xlane.xlu0 %111
      %v113 = vrot.slane %v112, 4
      %v114 = vadd.f32 %v112, %v113
      %v115 = vrot.slane %v114, 2
      %v116 = vadd.f32 %v114, %v115
      %v117 = vrot.slane %v116, 1
      %v118 = vadd.f32 %v116, %v117
      %s119 = vtos %v118
      %v120 = vstv %s119
      %121 = vst [vmem:[#allocation8] sm:$0xff] %v120
    $region25: #{tpu_custom_call.1} parent=1 // pred_fallthru
      _
    // Predicated region
    $region26: #{tpu_custom_call.1} parent=1 // pred_check
      _
    $region27: #{tpu_custom_call.1} parent=1 // pred_check_branch
      %123 = sbr.rel (0) target = $region29
    $region28: #{tpu_custom_call.1} parent=1 // pred_region
      %s125 = ssub.s32 128, 128
      %126 = vsyncadd [#allocation5], %s125
      %s128 = sshll.u32 [#allocation8], 4
      %s129 = int_to_ptr.vmem [resolvable:$true] %s128
      %131 = dma.vmem_to_hbm [thread:$0]  %s129, 128, %s2, [#allocation5]
    $region29: #{tpu_custom_call.1} parent=1 // pred_fallthru
      _
    // Predicated region
    $region30: #{tpu_custom_call.1} parent=1 // pred_check
      _
    $region31: #{tpu_custom_call.1} parent=1 // pred_check_branch
      %133 = sbr.rel (0) target = $region33
    $region32: #{tpu_custom_call.1} parent=1 // pred_region
      %134 = dma.done [#allocation5], 128
    $region33: #{tpu_custom_call.1} parent=1 // pred_fallthru
      _
    %135 = vsyncpa [#allocation4], 1
    %136 = vsyncpa [#allocation7], 1
    %137 = vsyncpa [#allocation5], 1

</llo_original>
